<compile_context>
chip_gen: v7x
topology: tpu7x:2x2x1
jax: 0.10.0
libtpu: 0.0.40
codegen_flags: <defaults>
</compile_context>

<pallas_src>
import jax
import jax.numpy as jnp
from jax.experimental import pallas as pl
from jax.experimental.pallas import tpu as pltpu


def _linear_layer_kernel(f_ref, s_ref, w_ref, b_ref, o_ref):
    # f_ref: (D, TN)       activation tile, N on the lane axis
    # s_ref: (1, TN)       per-column (per-ray) weight sum
    # w_ref: (out_dim, D)  full weight (PyTorch layout, no transpose needed)
    # b_ref: (out_dim, 1)  bias column
    # o_ref: (out_dim, TN) lane-dense output tile
    x = f_ref[...] * s_ref[...]                                # VPU, lane-dense
    acc = jnp.dot(w_ref[...], x,
                  preferred_element_type=jnp.float32)          # MXU: [out_dim, TN]
    o_ref[...] = (acc + b_ref[...]).astype(o_ref.dtype)


def _choose_row_tile(N, D, out_dim, itemsize, vmem_budget_bytes=16 * 1024 * 1024):
    """Largest lane-axis tile that fits a conservative VMEM budget.

    Prefers a single grid step (tn = N) when the whole problem fits; otherwise
    the largest multiple of 128 dividing N that stays under the budget.
    """
    # Double-buffered features + sum_w + output columns per lane of tile.
    per_col = 2 * (D + 1 + out_dim) * itemsize
    max_tn = max(128, vmem_budget_bytes // per_col)
    if N <= max_tn:
        return N  # single grid step, whole problem resident in VMEM
    tn = (max_tn // 128) * 128
    while tn >= 128 and N % tn != 0:
        tn -= 128
    if tn < 128:
        assert N % 128 == 0, (
            "H*W must be a multiple of 128 when it exceeds the VMEM budget")
        tn = 128
    return tn


def linear_layer_forward(features, sum_w, weight, bias, *, tn=None):
    """features: [D, H, W], sum_w: [H, W], weight: [out_dim, D], bias: [out_dim]."""
    D, H, W = features.shape
    out_dim = weight.shape[0]
    N = H * W

    # Free reshapes only — no transposes, no data movement in the wrapper.
    f = features.reshape(D, N)          # [D, N], already contiguous
    s = sum_w.reshape(1, N)             # [1, N]
    b = bias.reshape(out_dim, 1)        # [out_dim, 1]

    if tn is None:
        tn = _choose_row_tile(N, D, out_dim, jnp.dtype(features.dtype).itemsize)
    assert N % tn == 0, "lane tile must divide N = H*W"

    out = pl.pallas_call(
        _linear_layer_kernel,
        out_shape=jax.ShapeDtypeStruct((out_dim, N), features.dtype),
        grid_spec=pltpu.PrefetchScalarGridSpec(
            num_scalar_prefetch=0,
            grid=(N // tn,),
            in_specs=[
                pl.BlockSpec((D, tn), lambda i: (0, i)),        # activations
                pl.BlockSpec((1, tn), lambda i: (0, i)),        # sum_w row
                pl.BlockSpec((out_dim, D), lambda i: (0, 0)),   # weight (constant)
                pl.BlockSpec((out_dim, 1), lambda i: (0, 0)),   # bias (constant)
            ],
            out_specs=pl.BlockSpec((out_dim, tn), lambda i: (0, i)),
        ),
        compiler_params=pltpu.CompilerParams(
            dimension_semantics=("parallel",)),
    )(f, s, weight, b)

    # Free reshape: [out_dim, N] is already the desired [out_dim, H, W] layout.
    return out.reshape(out_dim, H, W)


def _reference_forward(features, sum_w, weight, bias):
    D, H, W = features.shape
    x = jnp.transpose(features, (1, 2, 0)).reshape(-1, D)
    x = x * sum_w.reshape(-1, 1)
    out = x @ weight.T + bias
    return jnp.transpose(out.reshape(H, W, -1), (2, 0, 1))


if __name__ == "__main__":
    # Small shapes consistent with the module: inChanel=D=8, H=W=16, out_dim=32.
    D, H, W, out_dim = 8, 16, 16, 32

    key = jax.random.PRNGKey(0)
    k_feat, k_w, k_wt, k_b = jax.random.split(key, 4)

    features = jax.random.normal(k_feat, (D, H, W), dtype=jnp.float32)
    sum_w = jax.random.uniform(k_w, (H, W), dtype=jnp.float32)

    # Deterministic parameter init (uniform, like torch.nn.Linear default range).
    bound = 1.0 / (D ** 0.5)
    weight = jax.random.uniform(k_wt, (out_dim, D), dtype=jnp.float32,
                                minval=-bound, maxval=bound)
    bias = jax.random.uniform(k_b, (out_dim,), dtype=jnp.float32,
                              minval=-bound, maxval=bound)

    out = jax.block_until_ready(
        linear_layer_forward(features, sum_w, weight, bias))

    ref = _reference_forward(features, sum_w, weight, bias)
    assert out.shape == (out_dim, H, W)
    assert jnp.allclose(out, ref, atol=1e-5, rtol=1e-5)

    print("KERNEL_OK")
</pallas_src>

<mosaic_0001>
module attributes {stable_mosaic.version = 11 : i64} {
  func.func @_linear_layer_kernel(%arg0: i32, %arg1: memref<8x256xf32, #tpu.memory_space<vmem>>, %arg2: memref<1x256xf32, #tpu.memory_space<vmem>>, %arg3: memref<32x8xf32, #tpu.memory_space<vmem>>, %arg4: memref<32x1xf32, #tpu.memory_space<vmem>>, %arg5: memref<32x256xf32, #tpu.memory_space<vmem>>) attributes {dimension_semantics = [#tpu.dimension_semantics<parallel>], iteration_bounds = array<i64: 1>, scalar_prefetch = 0 : i64, scratch_operands = 0 : i64, tpu.core_type = #tpu.core_type<tc>, window_params = [{transform_indices = @transform_0, window_bounds = array<i64: 8, 256>}, {transform_indices = @transform_1, window_bounds = array<i64: 1, 256>}, {pipeline_mode = #tpu.pipeline_mode<synchronous>, transform_indices = @transform_2, window_bounds = array<i64: 32, 8>}, {pipeline_mode = #tpu.pipeline_mode<synchronous>, transform_indices = @transform_3, window_bounds = array<i64: 32, 1>}, {transform_indices = @transform_4, window_bounds = array<i64: 32, 256>}]} {
    %c0 = arith.constant 0 : index
    %c0_0 = arith.constant 0 : index
    %0 = vector.load %arg1[%c0, %c0_0] : memref<8x256xf32, #tpu.memory_space<vmem>>, vector<8x256xf32>
    %c0_1 = arith.constant 0 : index
    %c0_2 = arith.constant 0 : index
    %1 = vector.load %arg2[%c0_1, %c0_2] : memref<1x256xf32, #tpu.memory_space<vmem>>, vector<1x256xf32>
    %2 = vector.broadcast %1 : vector<1x256xf32> to vector<8x256xf32>
    %3 = arith.mulf %0, %2 : vector<8x256xf32>
    %c0_3 = arith.constant 0 : index
    %c0_4 = arith.constant 0 : index
    %4 = vector.load %arg3[%c0_3, %c0_4] : memref<32x8xf32, #tpu.memory_space<vmem>>, vector<32x8xf32>
    %cst = arith.constant dense<0.000000e+00> : vector<32x256xf32>
    %5 = tpu.matmul %4, %3, %cst {dimension_numbers = #tpu.dot_dimension_numbers<[1], [0], [0], [1], [0, 0, 1, 1], [], []>} : vector<32x8xf32>, vector<8x256xf32>, vector<32x256xf32> -> vector<32x256xf32>
    %c0_5 = arith.constant 0 : index
    %c0_6 = arith.constant 0 : index
    %6 = vector.load %arg4[%c0_5, %c0_6] : memref<32x1xf32, #tpu.memory_space<vmem>>, vector<32x1xf32>
    %7 = vector.broadcast %6 : vector<32x1xf32> to vector<32x256xf32>
    %8 = arith.addf %5, %7 : vector<32x256xf32>
    %c0_7 = arith.constant 0 : index
    %c0_8 = arith.constant 0 : index
    %9 = vector.load %arg5[%c0_7, %c0_8] : memref<32x256xf32, #tpu.memory_space<vmem>>, vector<32x256xf32>
    tpu.vector_store %arg5[%c0_7, %c0_8], %8 {strides = array<i32>} : memref<32x256xf32, #tpu.memory_space<vmem>>, vector<32x256xf32>,
    return
  }
  func.func @transform_0(%arg0: i32) -> (i32, i32) {
    %c0_i32 = arith.constant 0 : i32
    %c0_i32_0 = arith.constant 0 : i32
    return %c0_i32, %arg0 : i32, i32
  }
  func.func @transform_1(%arg0: i32) -> (i32, i32) {
    %c0_i32 = arith.constant 0 : i32
    %c0_i32_0 = arith.constant 0 : i32
    return %c0_i32, %arg0 : i32, i32
  }
  func.func @transform_2(%arg0: i32) -> (i32, i32) {
    %c0_i32 = arith.constant 0 : i32
    %c0_i32_0 = arith.constant 0 : i32
    %c0_i32_1 = arith.constant 0 : i32
    return %c0_i32, %c0_i32_0 : i32, i32
  }
  func.func @transform_3(%arg0: i32) -> (i32, i32) {
    %c0_i32 = arith.constant 0 : i32
    %c0_i32_0 = arith.constant 0 : i32
    %c0_i32_1 = arith.constant 0 : i32
    return %c0_i32, %c0_i32_0 : i32, i32
  }
  func.func @transform_4(%arg0: i32) -> (i32, i32) {
    %c0_i32 = arith.constant 0 : i32
    %c0_i32_0 = arith.constant 0 : i32
    return %c0_i32, %arg0 : i32, i32
  }
}

</mosaic_0001>

<llo_original>
// kernel: tpu_custom_call.1
$region0: #{tpu_custom_call.1}
  #allocation0 [shape = 'u32[]', space=smem, size = 0x4, offset = 0x4, fixed_abs, tag = 'smem constant byte address 0x4 - core index']
  #allocation1 [shape = 'u32[144,128]{1,0:T(1,128)}', space=vmem, size = 0x12000, scoped, tag = 'internal scratch']
  %s0 = inlined_call_operand.vmem [shape: f32[8,256], index: 0, kind: input, shape index: {}]
  %s1 = inlined_call_operand.vmem [shape: f32[1,256], index: 1, kind: input, shape index: {}]
  %s2 = inlined_call_operand.vmem [shape: f32[32,8], index: 2, kind: input, shape index: {}]
  %s3 = inlined_call_operand.vmem [shape: f32[32,1], index: 3, kind: input, shape index: {}]
  %s4 = inlined_call_operand.hbm [shape: f32[32,256], index: 4, kind: output, shape index: {}]
  %s5 = sld [smem:[#allocation0]]
  $region26: #{tpu_custom_call.1} parent=0
    _
  %s7 = ssub.s32 1, %s5
  %s8 = scalar_select 0, %s7, %s5
  $region1: #{tpu_custom_call.1} parent=0
    #allocation2 [shape = 'u8[32768]{0}', space=vmem, size = 0x8000, scoped, tag = 'output window, operand 0, single buffered']
    #allocation3 [shape = 's32[1]{0}', space=sflag, size = 0x4, scoped, tag = 'scoped memory for tpu_custom_call.1']
    %9 = vsyncpa [#allocation3], 0
    // Predicated region
    $region2: #{tpu_custom_call.1} parent=1 // pred_check
      _
    $region3: #{tpu_custom_call.1} parent=1 // pred_check_branch
      %11 = sbr.rel (0) target = $region5
    $region4: #{tpu_custom_call.1} parent=1 // pred_region
      _
    $region5: #{tpu_custom_call.1} parent=1 // pred_fallthru
      _
    // Predicated region
    $region6: #{tpu_custom_call.1} parent=1 // pred_check
      _
    $region7: #{tpu_custom_call.1} parent=1 // pred_check_branch
      %13 = sbr.rel (0) target = $region9
    $region8: #{tpu_custom_call.1} parent=1 // pred_region
      _
    $region9: #{tpu_custom_call.1} parent=1 // pred_fallthru
      _
    // Predicated region
    $region10: #{tpu_custom_call.1} parent=1 // pred_check
      _
    $region11: #{tpu_custom_call.1} parent=1 // pred_check_branch
      %15 = sbr.rel (0) target = $region13
    $region12: #{tpu_custom_call.1} parent=1 // pred_region
      _
    $region13: #{tpu_custom_call.1} parent=1 // pred_fallthru
      _
    // Predicated region
    $region14: #{tpu_custom_call.1} parent=1 // pred_check
      _
    $region15: #{tpu_custom_call.1} parent=1 // pred_check_branch
      %17 = sbr.rel (0) target = $region17
    $region16: #{tpu_custom_call.1} parent=1 // pred_region
      _
    $region17: #{tpu_custom_call.1} parent=1 // pred_fallthru
      _
    %v18 = vld [vmem:[%s0] sm:$0xff]
    %v19 = vld [vmem:[%s0 + $0x8] sm:$0xff]
    %v20 = vld [vmem:[%s1] sm:$0x3]
    %v22 = vlaneseq
    %v23 = vshrl.u32 %v22, 7
    %v24 = vsub.s32 0, %v23
    %v25 = vrot.slane %v20, %v24
    %v26 = vlaneseq
    %v27 = vshrl.u32 %v26, 7
    %v28 = vsub.s32 1, %v27
    %v29 = vrot.slane %v20, %v28
    %v32 = vmul.f32 %v18, %v25
    %v33 = vmul.f32 %v19, %v29
    %v34 = vld [vmem:[%s2] sm:$0xff]
    %v35 = vld [vmem:[%s2 + $0x8] sm:$0xff]
    %v36 = vld [vmem:[%s2 + $0x10] sm:$0xff]
    %v37 = vld [vmem:[%s2 + $0x18] sm:$0xff]
    %v38 = vld [vmem:[%s3] sm:$0xff]
    %v39 = vld [vmem:[%s3 + $0x8] sm:$0xff]
    %v40 = vld [vmem:[%s3 + $0x10] sm:$0xff]
    %v41 = vld [vmem:[%s3 + $0x18] sm:$0xff]
    %43 = vset.pattern.permute.xlu0 0
    %44 = vperm.xlu0 %43, %v38
    %v45 = vpop.permute.xlu0 %44
    %48 = vset.pattern.permute.xlu0 0
    %49 = vperm.xlu0 %48, %v39
    %v50 = vpop.permute.xlu0 %49
    %53 = vset.pattern.permute.xlu0 0
    %54 = vperm.xlu0 %53, %v40
    %v55 = vpop.permute.xlu0 %54
    %58 = vset.pattern.permute.xlu0 0
    %59 = vperm.xlu0 %58, %v41
    %v60 = vpop.permute.xlu0 %59
    %vm62 = vcmask 64512
    %v64 = vsel %vm62, %v34, 0
    %v67 = vsel %vm62, %v35, 0
    %v70 = vsel %vm62, %v36, 0
    %v73 = vsel %vm62, %v37, 0
    %75 = vmatprep.subr.mxu0 %v33
    %76 = vmatpush1.msra.mxu0 %v32
    %77 = vmatprep.subr.mxu0 0.0
    %78 = vmatpush1.msra.mxu0 0.0
    %79 = vmatprep.subr.mxu0 0.0
    %80 = vmatpush1.msra.mxu0 0.0
    %81 = vmatprep.subr.mxu0 0.0
    %82 = vmatpush1.msra.mxu0 0.0
    %83 = vmatprep.subr.mxu0 0.0
    %84 = vmatpush1.msra.mxu0 0.0
    %85 = vmatprep.subr.mxu0 0.0
    %86 = vmatpush1.msra.mxu0 0.0
    %87 = vmatprep.subr.mxu0 0.0
    %88 = vmatpush1.msra.mxu0 0.0
    %89 = vmatprep.subr.mxu0 0.0
    %90 = vmatpush1.msra.mxu0 0.0
    %91 = vmatprep.subr.mxu0 0.0
    %92 = vmatpush1.msra.mxu0 0.0
    %93 = vmatprep.subr.mxu0 0.0
    %94 = vmatpush1.msra.mxu0 0.0
    %95 = vmatprep.subr.mxu0 0.0
    %96 = vmatpush1.msra.mxu0 0.0
    %97 = vmatprep.subr.mxu0 0.0
    %98 = vmatpush1.msra.mxu0 0.0
    %99 = vmatprep.subr.mxu0 0.0
    %100 = vmatpush1.msra.mxu0 0.0
    %101 = vmatprep.subr.mxu0 0.0
    %102 = vmatpush1.msra.mxu0 0.0
    %103 = vmatprep.subr.mxu0 0.0
    %104 = vmatpush1.msra.mxu0 0.0
    %105 = vmatprep.subr.mxu0 0.0
    %106 = vmatpush1.msra.mxu0 0.0
    %107 = vmatprep.subr.mxu0 0.0
    %108 = vmatpush1.msra.mxu0 0.0
    %109 = vmatprep.subr.mxu0 0.0
    %110 = vmatpush1.msra.mxu0 0.0
    %111 = vmatprep.subr.mxu0 0.0
    %112 = vmatpush1.msra.mxu0 0.0
    %113 = vmatprep.subr.mxu0 0.0
    %114 = vmatpush1.msra.mxu0 0.0
    %115 = vmatprep.subr.mxu0 0.0
    %116 = vmatpush1.msra.mxu0 0.0
    %117 = vmatprep.subr.mxu0 0.0
    %118 = vmatpush1.msra.mxu0 0.0
    %119 = vmatprep.subr.mxu0 0.0
    %120 = vmatpush1.msra.mxu0 0.0
    %121 = vmatprep.subr.mxu0 0.0
    %122 = vmatpush1.msra.mxu0 0.0
    %123 = vmatprep.subr.mxu0 0.0
    %124 = vmatpush1.msra.mxu0 0.0
    %125 = vmatprep.subr.mxu0 0.0
    %126 = vmatpush1.msra.mxu0 0.0
    %127 = vmatprep.subr.mxu0 0.0
    %128 = vmatpush1.msra.mxu0 0.0
    %129 = vmatprep.subr.mxu0 0.0
    %130 = vmatpush1.msra.mxu0 0.0
    %131 = vmatprep.subr.mxu0 0.0
    %132 = vmatpush1.msra.mxu0 0.0
    %133 = vmatprep.subr.mxu0 0.0
    %134 = vmatpush1.msra.mxu0 0.0
    %135 = vmatprep.subr.mxu0 0.0
    %136 = vmatpush1.msra.mxu0 0.0
    %137 = vmatprep.subr.mxu0 0.0
    %138 = vmatpush1.msra.mxu0 0.0
    %139 = vmatprep.mubr.f32.mxu0 0.0
    %140 = vmatmul.mubr.f32.gmra.mrb[0].mxu0 %v64
    %v141 = vpop.f32.mrb[0].mxu0
    %v142 = vadd.f32 %v45, %v141
    %v143 = vpop.f32.mrb[0].mxu0
    %v144 = vadd.f32 %v45, %v143
    %145 = vmatprep.mubr.f32.mxu0 0.0
    %146 = vmatmul.mubr.f32.gmra.mrb[0].mxu0 %v67
    %v147 = vpop.f32.mrb[0].mxu0
    %v148 = vadd.f32 %v50, %v147
    %v149 = vpop.f32.mrb[0].mxu0
    %v150 = vadd.f32 %v50, %v149
    %151 = vmatprep.mubr.f32.mxu0 0.0
    %152 = vmatmul.mubr.f32.gmra.mrb[0].mxu0 %v70
    %v153 = vpop.f32.mrb[0].mxu0
    %v154 = vadd.f32 %v55, %v153
    %v155 = vpop.f32.mrb[0].mxu0
    %v156 = vadd.f32 %v55, %v155
    %157 = vmatprep.mubr.f32.mxu0 0.0
    %158 = vmatmul.mubr.f32.gmra.mrb[0].mxu0 %v73
    %v159 = vpop.f32.mrb[0].mxu0
    %v160 = vadd.f32 %v60, %v159
    %v161 = vpop.f32.mrb[0].mxu0
    %v162 = vadd.f32 %v60, %v161
    %163 = vdwg.mxu0
    %164 = vst [vmem:[#allocation2] sm:$0xff] %v142
    %165 = vst [vmem:[#allocation2 + $0x8] sm:$0xff] %v144
    %166 = vst [vmem:[#allocation2 + $0x10] sm:$0xff] %v148
    %167 = vst [vmem:[#allocation2 + $0x18] sm:$0xff] %v150
    %168 = vst [vmem:[#allocation2 + $0x20] sm:$0xff] %v154
    %169 = vst [vmem:[#allocation2 + $0x28] sm:$0xff] %v156
    %170 = vst [vmem:[#allocation2 + $0x30] sm:$0xff] %v160
    %171 = vst [vmem:[#allocation2 + $0x38] sm:$0xff] %v162
    // Predicated region
    $region18: #{tpu_custom_call.1} parent=1 // pred_check
      _
    $region19: #{tpu_custom_call.1} parent=1 // pred_check_branch
      %173 = sbr.rel (0) target = $region21
    $region20: #{tpu_custom_call.1} parent=1 // pred_region
      %s175 = ssub.s32 1024, 1024
      %176 = vsyncadd [#allocation3], %s175
      %s177 = sshll.u32 [#allocation2], 4
      %s178 = int_to_ptr.vmem [resolvable:$true] %s177
      %183 = dma.vmem_to_hbm [thread:$0]  %s178, 1024, %s4, [#allocation3], 256, 256, 16
    $region21: #{tpu_custom_call.1} parent=1 // pred_fallthru
      _
    // Predicated region
    $region22: #{tpu_custom_call.1} parent=1 // pred_check
      _
    $region23: #{tpu_custom_call.1} parent=1 // pred_check_branch
      %185 = sbr.rel (0) target = $region25
    $region24: #{tpu_custom_call.1} parent=1 // pred_region
      %186 = dma.done [#allocation3], 1024
    $region25: #{tpu_custom_call.1} parent=1 // pred_fallthru
      _
    %187 = vsyncpa [#allocation3], 1

</llo_original>
